<compile_context>
chip_gen: v7x
topology: tpu7x:2x2x1
jax: 0.10.0
libtpu: 0.0.40
codegen_flags: <defaults>
</compile_context>

<pallas_src>
import math

import jax
import jax.numpy as jnp
from jax.experimental import pallas as pl
from jax.experimental.pallas import tpu as pltpu


_LANES = 1024                    # lane-dense last dim for the aligned path
_TILE_BYTES = 8 * 1024 * 1024    # per-tile budget; x4 buffers (in+out) = 32 MiB
_VMEM_LIMIT = 48 * 1024 * 1024   # explicit scoped-VMEM limit (< 64 MiB v7x physical)
_SMALL_N = 256 * 1024            # below this, plain XLA wins (dispatch dominates)


def _round_up(x: int, m: int) -> int:
    return ((x + m - 1) // m) * m


def _sublane_pack(dtype) -> int:
    # 8 for 4-byte, 16 for 2-byte, 32 for 1-byte dtypes (packed vreg rows).
    return max(8, 32 // jnp.dtype(dtype).itemsize)


def _temp_scale_kernel(temp_ref, x_ref, out_ref):
    # temp_ref: (1,) f32 scalar in SMEM.
    # True f32 divide (not reciprocal-multiply) for closer parity with the
    # PyTorch `logits / temperature`; memory-bound so the VPU/EUP cost is free.
    t = temp_ref[0]
    out_ref[...] = (x_ref[...].astype(jnp.float32) / t).astype(out_ref.dtype)


def _choose_block_rows(rows: int, cols: int, itemsize: int, pack: int) -> int:
    if rows <= pack:
        return rows  # block == full row extent (always a legal block dim)
    # Largest row count that fits the per-tile byte budget.
    budget_rows = max(pack, (_TILE_BYTES // (cols * itemsize)) // pack * pack)
    # Guarantee >= 2 grid steps so the "parallel" axis can shard across the
    # two v7x TensorCores (harmless on single-TC v5e/v6e).
    half_rows = _round_up(-(-rows // 2), pack)
    return min(budget_rows, half_rows)


def temperature_scale(logits: jax.Array, temperature: jax.Array,
                      *, force_kernel: bool = False,
                      donate_input: bool = False) -> jax.Array:
    """Equivalent of TemperatureScaling.forward(logits) = logits / temperature.

    logits:      any-shaped float array (typically (B, num_classes))
    temperature: (1,) parameter (nn.Parameter(torch.ones(1)))
    """
    orig_shape = logits.shape
    dtype = logits.dtype
    n = math.prod(orig_shape) if orig_shape else 1

    temp = jnp.asarray(temperature, dtype=jnp.float32).reshape(-1)[:1]  # (1,)
    temp_scalar = temp[0]

    # Small-input fast path: pallas_call dispatch dwarfs KBs of work; XLA
    # fuses a broadcast divide at full bandwidth with zero extra copies.
    # NOTE: PyTorch would promote sub-f32 logits to f32; we keep input dtype.
    if (n < _SMALL_N and not force_kernel) or n == 0:
        return (logits.astype(jnp.float32) / temp_scalar).astype(dtype)

    itemsize = jnp.dtype(dtype).itemsize
    pack = _sublane_pack(dtype)

    if n % _LANES == 0:
        # Zero-copy reshape to a lane-dense slab: full-width stores, no pad.
        rows, cols = n // _LANES, _LANES
    else:
        # Keep the natural 2-D layout (collapse leading dims); a cdiv grid
        # with edge blocks absorbs the ragged row remainder.
        cols = orig_shape[-1] if len(orig_shape) >= 1 else 1
        rows = n // cols
        if cols * itemsize > _TILE_BYTES:
            # Degenerate layout (single row exceeds the tile budget, e.g. a
            # huge odd-length 1-D array) — let XLA stream it.
            return (logits.astype(jnp.float32) / temp_scalar).astype(dtype)

    x2d = logits.reshape(rows, cols)
    block_rows = _choose_block_rows(rows, cols, itemsize, pack)
    grid_rows = pl.cdiv(rows, block_rows)

    out2d = pl.pallas_call(
        _temp_scale_kernel,
        out_shape=jax.ShapeDtypeStruct((rows, cols), dtype),
        grid=(grid_rows,),
        in_specs=[
            pl.BlockSpec(memory_space=pltpu.SMEM),                # temperature
            pl.BlockSpec((block_rows, cols), lambda i: (i, 0)),   # logits tile
        ],
        out_specs=pl.BlockSpec((block_rows, cols), lambda i: (i, 0)),
        compiler_params=pltpu.CompilerParams(
            dimension_semantics=("parallel",),   # megacore sharding on v7x
            vmem_limit_bytes=_VMEM_LIMIT,
        ),
        cost_estimate=pl.CostEstimate(
            flops=rows * cols,
            transcendentals=0,
            bytes_accessed=2 * rows * cols * itemsize,
        ),
        # Opt-in only: with the zero-copy reshape, aliasing would clobber the
        # caller's `logits` buffer. Enable only when the input is dead.
        input_output_aliases=({1: 0} if donate_input else {}),
    )(temp, x2d)

    return out2d.reshape(orig_shape)


if __name__ == "__main__":
    key = jax.random.PRNGKey(0)
    k1, k2, k3 = jax.random.split(key, 3)

    # nn.Parameter(torch.ones(1)) -> deterministic init of ones(1).
    temperature = jnp.ones((1,), dtype=jnp.float32)
    temperature2 = jnp.array([2.5], dtype=jnp.float32)

    # Module-typical small logits (B=8, C=32): XLA fast path.
    logits = jax.random.normal(k1, (8, 32), dtype=jnp.float32)
    out = temperature_scale(logits, temperature)
    jax.block_until_ready(out)
    assert out.shape == logits.shape and out.dtype == logits.dtype
    assert jnp.allclose(out, logits / temperature, rtol=1e-5, atol=1e-6)

    # Same small shape forced through the Pallas kernel (ragged 2-D path).
    out_k = temperature_scale(logits, temperature2, force_kernel=True)
    jax.block_until_ready(out_k)
    assert jnp.allclose(out_k, logits / temperature2, rtol=1e-5, atol=1e-6)

    # Lane-aligned kernel path: n % 1024 == 0 -> zero-copy lane-dense slab,
    # >= 2 grid steps (megacore-friendly).
    x_aligned = jax.random.normal(k2, (512, 2048), dtype=jnp.float32)
    out_a = temperature_scale(x_aligned, temperature2)
    jax.block_until_ready(out_a)
    assert jnp.allclose(out_a, x_aligned / temperature2, rtol=1e-5, atol=1e-6)

    # Ragged kernel path: edge blocks, no pad/slice HBM round trips.
    x_ragged = jax.random.normal(k3, (600, 1000), dtype=jnp.float32)
    out_r = temperature_scale(x_ragged, temperature2)
    jax.block_until_ready(out_r)
    assert jnp.allclose(out_r, x_ragged / temperature2, rtol=1e-5, atol=1e-6)

    print("KERNEL_OK")
</pallas_src>

<mosaic_0001>
module attributes {stable_mosaic.version = 11 : i64} {
  func.func @_temp_scale_kernel(%arg0: i32, %arg1: memref<1xf32, #tpu.memory_space<smem>>, %arg2: memref<8x32xf32, #tpu.memory_space<vmem>>, %arg3: memref<8x32xf32, #tpu.memory_space<vmem>>) attributes {dimension_semantics = [#tpu.dimension_semantics<parallel>], iteration_bounds = array<i64: 1>, scalar_prefetch = 0 : i64, scratch_operands = 0 : i64, tpu.core_type = #tpu.core_type<tc>, window_params = [{transform_indices = @transform_0, window_bounds = array<i64: 1>}, {transform_indices = @transform_1, window_bounds = array<i64: 8, 32>}, {transform_indices = @transform_2, window_bounds = array<i64: 8, 32>}]} {
    %c0 = arith.constant 0 : index
    %0 = memref.load %arg1[%c0] : memref<1xf32, #tpu.memory_space<smem>>
    %c0_0 = arith.constant 0 : index
    %c0_1 = arith.constant 0 : index
    %1 = vector.load %arg2[%c0_0, %c0_1] : memref<8x32xf32, #tpu.memory_space<vmem>>, vector<8x32xf32>
    %2 = vector.broadcast %0 : f32 to vector<8x32xf32>
    %3 = arith.divf %1, %2 : vector<8x32xf32>
    %c0_2 = arith.constant 0 : index
    %c0_3 = arith.constant 0 : index
    %4 = vector.load %arg3[%c0_2, %c0_3] : memref<8x32xf32, #tpu.memory_space<vmem>>, vector<8x32xf32>
    tpu.vector_store %arg3[%c0_2, %c0_3], %3 {strides = array<i32>} : memref<8x32xf32, #tpu.memory_space<vmem>>, vector<8x32xf32>,
    return
  }
  func.func @transform_0(%arg0: i32) -> i32 {
    %c0_i32 = arith.constant 0 : i32
    %c0_i32_0 = arith.constant 0 : i32
    return %c0_i32 : i32
  }
  func.func @transform_1(%arg0: i32) -> (i32, i32) {
    %c0_i32 = arith.constant 0 : i32
    %c0_i32_0 = arith.constant 0 : i32
    return %arg0, %c0_i32 : i32, i32
  }
  func.func @transform_2(%arg0: i32) -> (i32, i32) {
    %c0_i32 = arith.constant 0 : i32
    %c0_i32_0 = arith.constant 0 : i32
    return %arg0, %c0_i32 : i32, i32
  }
}

</mosaic_0001>

<llo_original>
// kernel: tpu_custom_call.1
$region0: #{tpu_custom_call.1}
  #allocation0 [shape = 'u32[]', space=smem, size = 0x4, offset = 0x4, fixed_abs, tag = 'smem constant byte address 0x4 - core index']
  #allocation1 [shape = 'u32[144,128]{1,0:T(1,128)}', space=vmem, size = 0x12000, scoped, tag = 'internal scratch']
  #allocation2 [shape = 'f32[1]{0:T(128)S(6)}', space=smem, size = 0x200, scoped, tag = 'scoped memory for tpu_custom_call.1']
  %s0 = inlined_call_operand.<no memory space> [shape: f32[1], index: 0, kind: input, shape index: {}]
  %s1 = inlined_call_operand.hbm [shape: f32[8,32], index: 1, kind: input, shape index: {}]
  %s2 = inlined_call_operand.hbm [shape: f32[8,32], index: 2, kind: output, shape index: {}]
  %s3 = sld [smem:[#allocation0]]
  $region22: #{tpu_custom_call.1} parent=0
    _
  %s5 = ssub.s32 1, %s3
  %s6 = scalar_select 0, %s5, %s3
  %7 = sst [smem:[#allocation2]] %s0
  $region1: #{tpu_custom_call.1} parent=0
    #allocation3 [shape = 'u8[4096]{0}', space=vmem, size = 0x1000, scoped, tag = 'input window, operand 1, single buffered']
    #allocation4 [shape = 's32[1]{0}', space=sflag, size = 0x4, scoped, tag = 'scoped memory for tpu_custom_call.1']
    #allocation5 [shape = 's32[1]{0}', space=sflag, size = 0x4, scoped, tag = 'scoped memory for tpu_custom_call.1']
    #allocation6 [shape = 'u8[4096]{0}', space=vmem, size = 0x1000, scoped, tag = 'output window, operand 0, single buffered']
    %8 = vsyncpa [#allocation4], 0
    %9 = vsyncpa [#allocation5], 0
    // Predicated region
    $region2: #{tpu_custom_call.1} parent=1 // pred_check
      _
    $region3: #{tpu_custom_call.1} parent=1 // pred_check_branch
      %11 = sbr.rel (0) target = $region5
    $region4: #{tpu_custom_call.1} parent=1 // pred_region
      _
    $region5: #{tpu_custom_call.1} parent=1 // pred_fallthru
      _
    // Predicated region
    $region6: #{tpu_custom_call.1} parent=1 // pred_check
      _
    $region7: #{tpu_custom_call.1} parent=1 // pred_check_branch
      %13 = sbr.rel (0) target = $region9
    $region8: #{tpu_custom_call.1} parent=1 // pred_region
      %s15 = ssub.s32 128, 128
      %16 = vsyncadd [#allocation4], %s15
      %s18 = sshll.u32 [#allocation3], 4
      %s19 = int_to_ptr.vmem [resolvable:$true] %s18
      %21 = dma.hbm_to_vmem [thread:$0]  %s1, 128, %s19, [#allocation4]
    $region9: #{tpu_custom_call.1} parent=1 // pred_fallthru
      _
    // Predicated region
    $region10: #{tpu_custom_call.1} parent=1 // pred_check
      _
    $region11: #{tpu_custom_call.1} parent=1 // pred_check_branch
      %23 = sbr.rel (0) target = $region13
    $region12: #{tpu_custom_call.1} parent=1 // pred_region
      %24 = dma.done [#allocation4], 128
    $region13: #{tpu_custom_call.1} parent=1 // pred_fallthru
      _
    %s25 = sld [smem:[#allocation2]]
    %v26 = vld [vmem:[#allocation3] sm:$0xff]
    %v27 = vstv %s25
    %v28 = vrcp.pop %v27
    %v29 = vmul.f32 %v26, %v28
    %vm30 = vcmask 261120
    %31 = vst.msk [vmem:[#allocation6] sm:$0xff] %vm30, %v29
    // Predicated region
    $region14: #{tpu_custom_call.1} parent=1 // pred_check
      _
    $region15: #{tpu_custom_call.1} parent=1 // pred_check_branch
      %33 = sbr.rel (0) target = $region17
    $region16: #{tpu_custom_call.1} parent=1 // pred_region
      %s35 = ssub.s32 128, 128
      %36 = vsyncadd [#allocation5], %s35
      %s38 = sshll.u32 [#allocation6], 4
      %s39 = int_to_ptr.vmem [resolvable:$true] %s38
      %41 = dma.vmem_to_hbm [thread:$0]  %s39, 128, %s2, [#allocation5]
    $region17: #{tpu_custom_call.1} parent=1 // pred_fallthru
      _
    // Predicated region
    $region18: #{tpu_custom_call.1} parent=1 // pred_check
      _
    $region19: #{tpu_custom_call.1} parent=1 // pred_check_branch
      %43 = sbr.rel (0) target = $region21
    $region20: #{tpu_custom_call.1} parent=1 // pred_region
      %44 = dma.done [#allocation5], 128
    $region21: #{tpu_custom_call.1} parent=1 // pred_fallthru
      _
    %45 = vsyncpa [#allocation4], 1
    %46 = vsyncpa [#allocation5], 1

</llo_original>
